<compile_context>
chip_gen: v7x
topology: tpu7x:2x2x1
jax: 0.10.0
libtpu: 0.0.40
codegen_flags: <defaults>
</compile_context>

<pallas_src>
import functools

import jax
import jax.numpy as jnp
from jax.experimental import pallas as pl
from jax.experimental.pallas import tpu as pltpu

_LANES = 512            # lane-dense last dim (multiple of 128)
_MAX_BLOCK_ROWS = 512   # 512x512 f32 tile = 1 MiB per input


def _round_up(v, m):
    return ((v + m - 1) // m) * m


def _bce_tile(x, y, alpha):
    """Element-wise BCE(sigmoid(alpha*x), sigmoid(alpha*y)) on one VMEM tile."""
    zx = alpha * x.astype(jnp.float32)
    zy = alpha * y.astype(jnp.float32)
    # log(sigmoid(zx)) and log(1 - sigmoid(zx)) share one exp and one log.
    lse = jnp.log(1.0 + jnp.exp(-jnp.abs(zx)))        # softplus(-|zx|)
    log_p = jnp.minimum(zx, 0.0) - lse                # = -softplus(-zx)
    log_1mp = jnp.minimum(-zx, 0.0) - lse             # = -softplus(zx)
    # Match torch.nn.functional.binary_cross_entropy's log clamp at -100.
    log_p = jnp.maximum(log_p, -100.0)
    log_1mp = jnp.maximum(log_1mp, -100.0)
    t = 1.0 / (1.0 + jnp.exp(-zy))
    return -(t * log_p + (1.0 - t) * log_1mp)


def _bce_reduce_kernel(x_ref, y_ref, psum_ref, *, alpha, n_valid,
                       block_rows, lanes):
    """Per-block partial sums; per-element loss never touches HBM."""
    r = pl.program_id(0)
    loss = _bce_tile(x_ref[...], y_ref[...], alpha)            # (BR, L) f32
    # Zero out the tail padding (flat element index >= n_valid).
    row = jax.lax.broadcasted_iota(jnp.int32, loss.shape, 0)
    lane = jax.lax.broadcasted_iota(jnp.int32, loss.shape, 1)
    gidx = (r * block_rows + row) * lanes + lane
    loss = jnp.where(gidx < n_valid, loss, 0.0)
    # (BR, L) -> (BR//8, 8, L) is a free vreg re-index; sum over the leading
    # axis is plain VPU adds (no cross-lane XLU reduce), and the (8, L) store
    # is fully lane/sublane dense.
    part = loss.reshape(block_rows // 8, 8, lanes).sum(axis=0)  # (8, L)
    psum_ref[...] = part


def _bce_elem_kernel(x_ref, y_ref, loss_ref, *, alpha):
    """reduction='none' path: write the per-element loss (lane-dense tiles)."""
    loss_ref[...] = _bce_tile(x_ref[...], y_ref[...], alpha)


def bce_sigmoid(inputs, targets, mask=None, *, reduction="mean", alpha=1.0,
                shape="trim"):
    """Pallas implementation of BCESigmoid.forward."""
    nb_old = targets.shape[1]
    if shape == "trim":
        x = inputs[:, :nb_old]
    elif shape == "sum":
        x = inputs[:, :nb_old]
        x = x.at[:, 0].set(jnp.sum(inputs[:, nb_old:], axis=1))
    else:
        raise ValueError(f"Unknown parameter to handle shape = {shape}.")
    assert x.shape == targets.shape, (x.shape, targets.shape)

    p_elems = int(x.size)
    rows = pl.cdiv(p_elems, _LANES)
    block_rows = min(_MAX_BLOCK_ROWS, _round_up(rows, 8))
    rows_padded = _round_up(rows, block_rows)
    grid = rows_padded // block_rows
    p_padded = rows_padded * _LANES

    # Row-major flatten is free; pad (zeros) only when the tail is ragged.
    xf = x.reshape(-1)
    yf = targets.reshape(-1)
    if p_padded != p_elems:
        xf = jnp.pad(xf, (0, p_padded - p_elems))
        yf = jnp.pad(yf, (0, p_padded - p_elems))
    x2 = xf.reshape(rows_padded, _LANES)
    y2 = yf.reshape(rows_padded, _LANES)

    in_specs = [pl.BlockSpec((block_rows, _LANES), lambda r: (r, 0)),
                pl.BlockSpec((block_rows, _LANES), lambda r: (r, 0))]
    cparams = pltpu.CompilerParams(dimension_semantics=("parallel",))

    if reduction in ("mean", "sum"):
        kernel = functools.partial(
            _bce_reduce_kernel, alpha=float(alpha), n_valid=p_elems,
            block_rows=block_rows, lanes=_LANES)
        partials = pl.pallas_call(
            kernel,
            out_shape=jax.ShapeDtypeStruct((grid * 8, _LANES), jnp.float32),
            grid_spec=pltpu.PrefetchScalarGridSpec(
                num_scalar_prefetch=0,
                grid=(grid,),
                in_specs=in_specs,
                out_specs=pl.BlockSpec((8, _LANES), lambda r: (r, 0))),
            compiler_params=cparams,
        )(x2, y2)
        total = jnp.sum(partials)
        loss = total / jnp.float32(p_elems) if reduction == "mean" else total
    elif reduction == "none":
        kernel = functools.partial(_bce_elem_kernel, alpha=float(alpha))
        loss2 = pl.pallas_call(
            kernel,
            out_shape=jax.ShapeDtypeStruct((rows_padded, _LANES), jnp.float32),
            grid_spec=pltpu.PrefetchScalarGridSpec(
                num_scalar_prefetch=0,
                grid=(grid,),
                in_specs=in_specs,
                out_specs=pl.BlockSpec((block_rows, _LANES),
                                       lambda r: (r, 0))),
            compiler_params=cparams,
        )(x2, y2)
        loss = loss2.reshape(-1)[:p_elems].reshape(targets.shape)
    else:
        raise ValueError(f"Unsupported reduction = {reduction}.")

    # Faithful to the module: mask scales the (possibly already reduced) loss,
    # then a final mean / sum is applied again.
    if mask is not None:
        loss = loss * mask.astype(jnp.float32)
    if reduction == "mean":
        return jnp.mean(loss)
    elif reduction == "sum":
        return jnp.sum(loss)
    return loss


def _reference(inputs, targets, mask=None, *, reduction="mean", alpha=1.0,
               shape="trim"):
    """Plain-JAX reference mirroring the PyTorch module exactly."""
    nb_old = targets.shape[1]
    if shape == "trim":
        x = inputs[:, :nb_old]
    else:  # 'sum'
        x = inputs[:, :nb_old]
        x = x.at[:, 0].set(jnp.sum(inputs[:, nb_old:], axis=1))
    p = jax.nn.sigmoid(alpha * x.astype(jnp.float32))
    t = jax.nn.sigmoid(alpha * targets.astype(jnp.float32))
    log_p = jnp.maximum(jnp.log(p), -100.0)
    log_1mp = jnp.maximum(jnp.log(1.0 - p), -100.0)
    loss = -(t * log_p + (1.0 - t) * log_1mp)
    if reduction == "mean":
        loss = loss.mean()
    elif reduction == "sum":
        loss = loss.sum()
    if mask is not None:
        loss = loss * mask.astype(jnp.float32)
    if reduction == "mean":
        return jnp.mean(loss)
    elif reduction == "sum":
        return jnp.sum(loss)
    return loss


if __name__ == "__main__":
    key = jax.random.PRNGKey(0)
    k1, k2 = jax.random.split(key)

    N, C_new, C_old, H, W = 2, 6, 4, 16, 16
    inputs = jax.random.normal(k1, (N, C_new, H, W), dtype=jnp.float32)
    targets = jax.random.normal(k2, (N, C_old, H, W), dtype=jnp.float32)

    # Module defaults: reduction='mean', alpha=1.0, shape='trim'.
    out_mean = jax.block_until_ready(
        bce_sigmoid(inputs, targets, reduction="mean", alpha=1.0, shape="trim"))
    ref_mean = _reference(inputs, targets, reduction="mean", alpha=1.0,
                          shape="trim")
    assert jnp.allclose(out_mean, ref_mean, rtol=1e-5, atol=1e-6), \
        (out_mean, ref_mean)

    # reduction='sum' with shape='sum' and a non-default alpha.
    out_sum = jax.block_until_ready(
        bce_sigmoid(inputs, targets, reduction="sum", alpha=0.5, shape="sum"))
    ref_sum = _reference(inputs, targets, reduction="sum", alpha=0.5,
                         shape="sum")
    assert jnp.allclose(out_sum, ref_sum, rtol=1e-5, atol=1e-5), \
        (out_sum, ref_sum)

    # reduction='none' per-element path.
    out_none = jax.block_until_ready(
        bce_sigmoid(inputs, targets, reduction="none", alpha=1.0, shape="trim"))
    ref_none = _reference(inputs, targets, reduction="none", alpha=1.0,
                          shape="trim")
    assert out_none.shape == ref_none.shape, (out_none.shape, ref_none.shape)
    assert jnp.allclose(out_none, ref_none, rtol=1e-5, atol=1e-6)

    print("KERNEL_OK")
</pallas_src>

<mosaic_0001>
module attributes {stable_mosaic.version = 11 : i64} {
  func.func @_bce_reduce_kernel(%arg0: i32, %arg1: memref<8x512xf32, #tpu.memory_space<vmem>>, %arg2: memref<8x512xf32, #tpu.memory_space<vmem>>, %arg3: memref<8x512xf32, #tpu.memory_space<vmem>>) attributes {dimension_semantics = [#tpu.dimension_semantics<parallel>], iteration_bounds = array<i64: 1>, scalar_prefetch = 0 : i64, scratch_operands = 0 : i64, tpu.core_type = #tpu.core_type<tc>, window_params = [{transform_indices = @transform_0, window_bounds = array<i64: 8, 512>}, {transform_indices = @transform_1, window_bounds = array<i64: 8, 512>}, {transform_indices = @transform_2, window_bounds = array<i64: 8, 512>}]} {
    %c0 = arith.constant 0 : index
    %c0_0 = arith.constant 0 : index
    %0 = vector.load %arg1[%c0, %c0_0] : memref<8x512xf32, #tpu.memory_space<vmem>>, vector<8x512xf32>
    %c0_1 = arith.constant 0 : index
    %c0_2 = arith.constant 0 : index
    %1 = vector.load %arg2[%c0_1, %c0_2] : memref<8x512xf32, #tpu.memory_space<vmem>>, vector<8x512xf32>
    %cst = arith.constant 1.000000e+00 : f32
    %2 = vector.broadcast %cst : f32 to vector<8x512xf32>
    %3 = arith.mulf %2, %0 : vector<8x512xf32>
    %cst_3 = arith.constant 1.000000e+00 : f32
    %4 = vector.broadcast %cst_3 : f32 to vector<8x512xf32>
    %5 = arith.mulf %4, %1 : vector<8x512xf32>
    %6 = math.absf %3 : vector<8x512xf32>
    %cst_4 = arith.constant 0.000000e+00 : f32
    %7 = vector.broadcast %cst_4 : f32 to vector<8x512xf32>
    %8 = arith.subf %7, %6 : vector<8x512xf32>
    %9 = math.exp %8 : vector<8x512xf32>
    %cst_5 = arith.constant 1.000000e+00 : f32
    %10 = vector.broadcast %cst_5 : f32 to vector<8x512xf32>
    %11 = arith.addf %10, %9 : vector<8x512xf32>
    %12 = math.log %11 : vector<8x512xf32>
    %cst_6 = arith.constant 0.000000e+00 : f32
    %13 = vector.broadcast %cst_6 : f32 to vector<8x512xf32>
    %14 = arith.minimumf %3, %13 : vector<8x512xf32>
    %15 = arith.subf %14, %12 : vector<8x512xf32>
    %cst_7 = arith.constant 0.000000e+00 : f32
    %16 = vector.broadcast %cst_7 : f32 to vector<8x512xf32>
    %17 = arith.subf %16, %3 : vector<8x512xf32>
    %cst_8 = arith.constant 0.000000e+00 : f32
    %18 = vector.broadcast %cst_8 : f32 to vector<8x512xf32>
    %19 = arith.minimumf %17, %18 : vector<8x512xf32>
    %20 = arith.subf %19, %12 : vector<8x512xf32>
    %cst_9 = arith.constant -1.000000e+02 : f32
    %21 = vector.broadcast %cst_9 : f32 to vector<8x512xf32>
    %22 = arith.maximumf %15, %21 : vector<8x512xf32>
    %cst_10 = arith.constant -1.000000e+02 : f32
    %23 = vector.broadcast %cst_10 : f32 to vector<8x512xf32>
    %24 = arith.maximumf %20, %23 : vector<8x512xf32>
    %cst_11 = arith.constant 0.000000e+00 : f32
    %25 = vector.broadcast %cst_11 : f32 to vector<8x512xf32>
    %26 = arith.subf %25, %5 : vector<8x512xf32>
    %27 = math.exp %26 : vector<8x512xf32>
    %cst_12 = arith.constant 1.000000e+00 : f32
    %28 = vector.broadcast %cst_12 : f32 to vector<8x512xf32>
    %29 = arith.addf %28, %27 : vector<8x512xf32>
    %cst_13 = arith.constant 1.000000e+00 : f32
    %30 = vector.broadcast %cst_13 : f32 to vector<8x512xf32>
    %31 = arith.divf %30, %29 : vector<8x512xf32>
    %32 = arith.mulf %31, %22 : vector<8x512xf32>
    %cst_14 = arith.constant 1.000000e+00 : f32
    %33 = vector.broadcast %cst_14 : f32 to vector<8x512xf32>
    %34 = arith.subf %33, %31 : vector<8x512xf32>
    %35 = arith.mulf %34, %24 : vector<8x512xf32>
    %36 = arith.addf %32, %35 : vector<8x512xf32>
    %cst_15 = arith.constant 0.000000e+00 : f32
    %37 = vector.broadcast %cst_15 : f32 to vector<8x512xf32>
    %38 = arith.subf %37, %36 : vector<8x512xf32>
    %39 = tpu.iota {dimensions = array<i32: 0>} : vector<8x512xi32>
    %40 = tpu.iota {dimensions = array<i32: 1>} : vector<8x512xi32>
    %c8_i32 = arith.constant 8 : i32
    %41 = arith.muli %arg0, %c8_i32 : i32
    %42 = vector.broadcast %41 : i32 to vector<8x512xi32>
    %43 = arith.addi %42, %39 : vector<8x512xi32>
    %c512_i32 = arith.constant 512 : i32
    %44 = vector.broadcast %c512_i32 : i32 to vector<8x512xi32>
    %45 = arith.muli %43, %44 : vector<8x512xi32>
    %46 = arith.addi %45, %40 : vector<8x512xi32>
    %c2048_i32 = arith.constant 2048 : i32
    %47 = vector.broadcast %c2048_i32 : i32 to vector<8x512xi32>
    %48 = arith.cmpi slt, %46, %47 : vector<8x512xi32>
    %cst_16 = arith.constant 0.000000e+00 : f32
    %49 = vector.broadcast %cst_16 : f32 to vector<8x512xf32>
    %50 = arith.select %48, %38, %49 : vector<8x512xi1>, vector<8x512xf32>
    %51 = vector.shape_cast %50 : vector<8x512xf32> to vector<1x8x512xf32>
    %cst_17 = arith.constant dense<0.000000e+00> : vector<8x512xf32>
    %52 = vector.multi_reduction <add>, %51, %cst_17 [0] : vector<1x8x512xf32> to vector<8x512xf32>
    %c0_18 = arith.constant 0 : index
    %c0_19 = arith.constant 0 : index
    %53 = vector.load %arg3[%c0_18, %c0_19] : memref<8x512xf32, #tpu.memory_space<vmem>>, vector<8x512xf32>
    tpu.vector_store %arg3[%c0_18, %c0_19], %52 {strides = array<i32>} : memref<8x512xf32, #tpu.memory_space<vmem>>, vector<8x512xf32>,
    return
  }
  func.func @transform_0(%arg0: i32) -> (i32, i32) {
    %c0_i32 = arith.constant 0 : i32
    %c0_i32_0 = arith.constant 0 : i32
    return %arg0, %c0_i32 : i32, i32
  }
  func.func @transform_1(%arg0: i32) -> (i32, i32) {
    %c0_i32 = arith.constant 0 : i32
    %c0_i32_0 = arith.constant 0 : i32
    return %arg0, %c0_i32 : i32, i32
  }
  func.func @transform_2(%arg0: i32) -> (i32, i32) {
    %c0_i32 = arith.constant 0 : i32
    %c0_i32_0 = arith.constant 0 : i32
    return %arg0, %c0_i32 : i32, i32
  }
}

</mosaic_0001>

<llo_original>
// kernel: tpu_custom_call.1
$region0: #{tpu_custom_call.1}
  #allocation0 [shape = 'u32[]', space=smem, size = 0x4, offset = 0x4, fixed_abs, tag = 'smem constant byte address 0x4 - core index']
  #allocation1 [shape = 'u32[144,128]{1,0:T(1,128)}', space=vmem, size = 0x12000, scoped, tag = 'internal scratch']
  %s0 = inlined_call_operand.hbm [shape: f32[8,512], index: 0, kind: input, shape index: {}]
  %s1 = inlined_call_operand.hbm [shape: f32[8,512], index: 1, kind: input, shape index: {}]
  %s2 = inlined_call_operand.hbm [shape: f32[8,512], index: 2, kind: output, shape index: {}]
  %s3 = sld [smem:[#allocation0]]
  $region26: #{tpu_custom_call.1} parent=0
    _
  %s5 = ssub.s32 1, %s3
  %s6 = scalar_select 0, %s5, %s3
  $region1: #{tpu_custom_call.1} parent=0
    #allocation2 [shape = 'u8[16384]{0}', space=vmem, size = 0x4000, scoped, tag = 'input window, operand 0, single buffered']
    #allocation3 [shape = 's32[1]{0}', space=sflag, size = 0x4, scoped, tag = 'scoped memory for tpu_custom_call.1']
    #allocation4 [shape = 's32[1]{0}', space=sflag, size = 0x4, scoped, tag = 'scoped memory for tpu_custom_call.1']
    #allocation5 [shape = 'u8[16384]{0}', space=vmem, size = 0x4000, scoped, tag = 'input window, operand 1, single buffered']
    #allocation6 [shape = 's32[1]{0}', space=sflag, size = 0x4, scoped, tag = 'scoped memory for tpu_custom_call.1']
    #allocation7 [shape = 'u8[16384]{0}', space=vmem, size = 0x4000, scoped, tag = 'output window, operand 0, single buffered']
    %7 = vsyncpa [#allocation3], 0
    %8 = vsyncpa [#allocation6], 0
    %9 = vsyncpa [#allocation4], 0
    // Predicated region
    $region2: #{tpu_custom_call.1} parent=1 // pred_check
      _
    $region3: #{tpu_custom_call.1} parent=1 // pred_check_branch
      %11 = sbr.rel (0) target = $region5
    $region4: #{tpu_custom_call.1} parent=1 // pred_region
      %s13 = ssub.s32 512, 512
      %14 = vsyncadd [#allocation3], %s13
      %s16 = sshll.u32 [#allocation2], 4
      %s17 = int_to_ptr.vmem [resolvable:$true] %s16
      %19 = dma.hbm_to_vmem [thread:$0]  %s0, 512, %s17, [#allocation3]
    $region5: #{tpu_custom_call.1} parent=1 // pred_fallthru
      _
    // Predicated region
    $region6: #{tpu_custom_call.1} parent=1 // pred_check
      _
    $region7: #{tpu_custom_call.1} parent=1 // pred_check_branch
      %21 = sbr.rel (0) target = $region9
    $region8: #{tpu_custom_call.1} parent=1 // pred_region
      %s23 = ssub.s32 512, 512
      %24 = vsyncadd [#allocation6], %s23
      %s26 = sshll.u32 [#allocation5], 4
      %s27 = int_to_ptr.vmem [resolvable:$true] %s26
      %29 = dma.hbm_to_vmem [thread:$0]  %s1, 512, %s27, [#allocation6]
    $region9: #{tpu_custom_call.1} parent=1 // pred_fallthru
      _
    // Predicated region
    $region10: #{tpu_custom_call.1} parent=1 // pred_check
      _
    $region11: #{tpu_custom_call.1} parent=1 // pred_check_branch
      %31 = sbr.rel (0) target = $region13
    $region12: #{tpu_custom_call.1} parent=1 // pred_region
      %32 = dma.done [#allocation3], 512
    $region13: #{tpu_custom_call.1} parent=1 // pred_fallthru
      _
    // Predicated region
    $region14: #{tpu_custom_call.1} parent=1 // pred_check
      _
    $region15: #{tpu_custom_call.1} parent=1 // pred_check_branch
      %34 = sbr.rel (0) target = $region17
    $region16: #{tpu_custom_call.1} parent=1 // pred_region
      %35 = dma.done [#allocation6], 512
    $region17: #{tpu_custom_call.1} parent=1 // pred_fallthru
      _
    %v36 = vld [vmem:[#allocation2] sm:$0xff]
    %v37 = vld [vmem:[#allocation2 + $0x8] sm:$0xff]
    %v38 = vld [vmem:[#allocation2 + $0x10] sm:$0xff]
    %v39 = vld [vmem:[#allocation2 + $0x18] sm:$0xff]
    %v40 = vld [vmem:[#allocation5] sm:$0xff]
    %v41 = vld [vmem:[#allocation5 + $0x8] sm:$0xff]
    %v42 = vld [vmem:[#allocation5 + $0x10] sm:$0xff]
    %v43 = vld [vmem:[#allocation5 + $0x18] sm:$0xff]
    %v44 = vand.u32 2147483647, %v36
    %v45 = vand.u32 2147483647, %v37
    %v46 = vand.u32 2147483647, %v38
    %v47 = vand.u32 2147483647, %v39
    %v48 = vsub.f32 0.0, %v44
    %v49 = vsub.f32 0.0, %v45
    %v50 = vsub.f32 0.0, %v46
    %v51 = vsub.f32 0.0, %v47
    %v52 = vmul.f32 %v48, 1.442695
    %v53 = vpow.pop %v52
    %v54 = vmul.f32 %v49, 1.442695
    %v55 = vpow.pop %v54
    %v56 = vmul.f32 %v50, 1.442695
    %v57 = vpow.pop %v56
    %v58 = vmul.f32 %v51, 1.442695
    %v59 = vpow.pop %v58
    %v60 = vadd.f32 %v53, 1.0
    %v61 = vadd.f32 %v55, 1.0
    %v62 = vadd.f32 %v57, 1.0
    %v63 = vadd.f32 %v59, 1.0
    %v64 = vlog2.pop %v60
    %v65 = vmul.f32 %v64, 0.6931472
    %v66 = vlog2.pop %v61
    %v67 = vmul.f32 %v66, 0.6931472
    %v68 = vlog2.pop %v62
    %v69 = vmul.f32 %v68, 0.6931472
    %v70 = vlog2.pop %v63
    %v71 = vmul.f32 %v70, 0.6931472
    %v72 = vmin.f32 %v36, 0.0
    %v73 = vmin.f32 %v37, 0.0
    %v74 = vmin.f32 %v38, 0.0
    %v75 = vmin.f32 %v39, 0.0
    %v76 = vsub.f32 %v72, %v65
    %v77 = vsub.f32 %v73, %v67
    %v78 = vsub.f32 %v74, %v69
    %v79 = vsub.f32 %v75, %v71
    %v80 = vsub.f32 0.0, %v36
    %v81 = vsub.f32 0.0, %v37
    %v82 = vsub.f32 0.0, %v38
    %v83 = vsub.f32 0.0, %v39
    %v84 = vmin.f32 %v80, 0.0
    %v85 = vmin.f32 %v81, 0.0
    %v86 = vmin.f32 %v82, 0.0
    %v87 = vmin.f32 %v83, 0.0
    %v88 = vsub.f32 %v84, %v65
    %v89 = vsub.f32 %v85, %v67
    %v90 = vsub.f32 %v86, %v69
    %v91 = vsub.f32 %v87, %v71
    %v92 = vmax.f32 %v76, -100.0
    %v93 = vmax.f32 %v77, -100.0
    %v94 = vmax.f32 %v78, -100.0
    %v95 = vmax.f32 %v79, -100.0
    %v96 = vmax.f32 %v88, -100.0
    %v97 = vmax.f32 %v89, -100.0
    %v98 = vmax.f32 %v90, -100.0
    %v99 = vmax.f32 %v91, -100.0
    %v100 = vsub.f32 0.0, %v40
    %v101 = vsub.f32 0.0, %v41
    %v102 = vsub.f32 0.0, %v42
    %v103 = vsub.f32 0.0, %v43
    %v104 = vmul.f32 %v100, 1.442695
    %v105 = vpow.pop %v104
    %v106 = vmul.f32 %v101, 1.442695
    %v107 = vpow.pop %v106
    %v108 = vmul.f32 %v102, 1.442695
    %v109 = vpow.pop %v108
    %v110 = vmul.f32 %v103, 1.442695
    %v111 = vpow.pop %v110
    %v112 = vadd.f32 %v105, 1.0
    %v113 = vadd.f32 %v107, 1.0
    %v114 = vadd.f32 %v109, 1.0
    %v115 = vadd.f32 %v111, 1.0
    %v116 = vrcp.pop %v112
    %v117 = vmul.f32 1.0, %v116
    %v118 = vrcp.pop %v113
    %v119 = vmul.f32 1.0, %v118
    %v120 = vrcp.pop %v114
    %v121 = vmul.f32 1.0, %v120
    %v122 = vrcp.pop %v115
    %v123 = vmul.f32 1.0, %v122
    %v124 = vmul.f32 %v117, %v92
    %v125 = vmul.f32 %v119, %v93
    %v126 = vmul.f32 %v121, %v94
    %v127 = vmul.f32 %v123, %v95
    %v128 = vsub.f32 1.0, %v117
    %v129 = vsub.f32 1.0, %v119
    %v130 = vsub.f32 1.0, %v121
    %v131 = vsub.f32 1.0, %v123
    %v132 = vmul.f32 %v128, %v96
    %v133 = vmul.f32 %v129, %v97
    %v134 = vmul.f32 %v130, %v98
    %v135 = vmul.f32 %v131, %v99
    %v136 = vadd.f32 %v124, %v132
    %v137 = vadd.f32 %v125, %v133
    %v138 = vadd.f32 %v126, %v134
    %v139 = vadd.f32 %v127, %v135
    %v140 = vsub.f32 0.0, %v136
    %v141 = vsub.f32 0.0, %v137
    %v142 = vsub.f32 0.0, %v138
    %v143 = vsub.f32 0.0, %v139
    %v144 = vlaneseq
    %v145 = vshrl.u32 %v144, 7
    %v146 = vlaneseq
    %v147 = vand.u32 %v146, 127
    %v148 = vadd.s32 %v147, 128
    %v149 = vadd.s32 %v147, 256
    %v150 = vadd.s32 %v147, 384
    %s151 = smul.u32 0, 8
    %v152 = vstv %s151
    %v153 = vadd.s32 %v152, %v145
    %v154 = vmul.u32 %v153, 512
    %v155 = vadd.s32 %v154, %v147
    %v156 = vadd.s32 %v154, %v148
    %v157 = vadd.s32 %v154, %v149
    %v158 = vadd.s32 %v154, %v150
    %vm159 = vcmp.lt.s32.totalorder %v155, 2048
    %vm160 = vcmp.lt.s32.totalorder %v156, 2048
    %vm161 = vcmp.lt.s32.totalorder %v157, 2048
    %vm162 = vcmp.lt.s32.totalorder %v158, 2048
    %v163 = vsel %vm159, %v140, 0.0
    %v164 = vsel %vm160, %v141, 0.0
    %v165 = vsel %vm161, %v142, 0.0
    %v166 = vsel %vm162, %v143, 0.0
    %v167 = vadd.f32 %v163, 0.0
    %v168 = vadd.f32 %v164, 0.0
    %v169 = vadd.f32 %v165, 0.0
    %v170 = vadd.f32 %v166, 0.0
    %171 = vst [vmem:[#allocation7] sm:$0xff] %v167
    %172 = vst [vmem:[#allocation7 + $0x8] sm:$0xff] %v168
    %173 = vst [vmem:[#allocation7 + $0x10] sm:$0xff] %v169
    %174 = vst [vmem:[#allocation7 + $0x18] sm:$0xff] %v170
    // Predicated region
    $region18: #{tpu_custom_call.1} parent=1 // pred_check
      _
    $region19: #{tpu_custom_call.1} parent=1 // pred_check_branch
      %176 = sbr.rel (0) target = $region21
    $region20: #{tpu_custom_call.1} parent=1 // pred_region
      %s178 = ssub.s32 512, 512
      %179 = vsyncadd [#allocation4], %s178
      %s181 = sshll.u32 [#allocation7], 4
      %s182 = int_to_ptr.vmem [resolvable:$true] %s181
      %184 = dma.vmem_to_hbm [thread:$0]  %s182, 512, %s2, [#allocation4]
    $region21: #{tpu_custom_call.1} parent=1 // pred_fallthru
      _
    // Predicated region
    $region22: #{tpu_custom_call.1} parent=1 // pred_check
      _
    $region23: #{tpu_custom_call.1} parent=1 // pred_check_branch
      %186 = sbr.rel (0) target = $region25
    $region24: #{tpu_custom_call.1} parent=1 // pred_region
      %187 = dma.done [#allocation4], 512
    $region25: #{tpu_custom_call.1} parent=1 // pred_fallthru
      _
    %188 = vsyncpa [#allocation3], 1
    %189 = vsyncpa [#allocation6], 1
    %190 = vsyncpa [#allocation4], 1

</llo_original>
